<compile_context>
chip_gen: v7x
topology: tpu7x:2x2x1
jax: 0.10.0
libtpu: 0.0.40
codegen_flags: <defaults>
</compile_context>

<pallas_src>
import functools

import jax
import jax.numpy as jnp
from jax.experimental import pallas as pl
from jax.experimental.pallas import tpu as pltpu

NEG_SLOPE = 0.01  # F.leaky_relu default


def _round_up(n, m):
    return ((n + m - 1) // m) * m


def _leaky_relu(x):
    # max(x, a*x) == leaky_relu(x) for 0 < a < 1; cheaper than cmp+mul+select.
    return jnp.maximum(x, NEG_SLOPE * x)


def _ai_mlp_kernel(out_size, x_ref, w1_ref, b1_ref, w2_ref, b2_ref,
                   w3_ref, b3_ref, o_ref):
    # In-kernel bf16 cast of the f32 input tile (VPU op, hidden under DMA).
    x = x_ref[...].astype(jnp.bfloat16)

    # linear1 + leaky_relu   (bf16 MXU operands, f32 accumulate, f32 epilogue)
    h1 = jnp.dot(x, w1_ref[...],
                 preferred_element_type=jnp.float32) + b1_ref[...]
    h1 = _leaky_relu(h1)

    # linear2 + leaky_relu
    h2 = jnp.dot(h1.astype(jnp.bfloat16), w2_ref[...],
                 preferred_element_type=jnp.float32) + b2_ref[...]
    h2 = _leaky_relu(h2)

    # linear4 (logits padded to 128 lanes; padded lanes carry -1e30 via b3,
    # so the softmax reduction over all 128 lanes is already safe).
    logits = jnp.dot(h2.astype(jnp.bfloat16), w3_ref[...],
                     preferred_element_type=jnp.float32) + b3_ref[...]

    # numerically-stable log_softmax over the last dim
    m = jnp.max(logits, axis=-1, keepdims=True)
    shifted = logits - m
    lse = jnp.log(jnp.sum(jnp.exp(shifted), axis=-1, keepdims=True))

    # Store only the valid logit lanes (narrow masked store beats writing a
    # 128-lane padded f32 slab + a separate XLA slice pass).
    o_ref[...] = (shifted[:, :out_size] - lse).astype(o_ref.dtype)


def _default_tile_b():
    # v5e: single vector-store slot + no bf16 VPU -> cap tiles lower.
    try:
        kind = jax.devices()[0].device_kind.lower()
    except Exception:  # pragma: no cover - defensive only
        kind = ""
    return 512 if "v5" in kind else 1024


def _pick_tile_b(B, tile_b):
    """16-aligned batch tile; whole batch in one step when small, otherwise
    >= 2 tiles so v7x megacore sharding actually happens."""
    tile_b = max(16, _round_up(tile_b, 16))
    if B <= tile_b:
        if B > 256:
            return _round_up(pl.cdiv(B, 2), 16)
        return min(tile_b, _round_up(B, 16))
    return tile_b


def ai_forward(x, prep, *, tile_b=None):
    """x: [B, inputSize] float32.  prep: dict from prepare_params()."""
    B, in_dim = x.shape
    out_size = prep["out_size"]
    h1 = prep["w1"].shape[1]
    h2 = prep["w2"].shape[1]
    out_pad = prep["w3"].shape[1]

    if tile_b is None:
        tile_b = _default_tile_b()
    tb = _pick_tile_b(B, tile_b)
    grid = (pl.cdiv(B, tb),)

    kernel = functools.partial(_ai_mlp_kernel, out_size)

    return pl.pallas_call(
        kernel,
        out_shape=jax.ShapeDtypeStruct((B, out_size), jnp.float32),
        grid=grid,
        in_specs=[
            pl.BlockSpec((tb, in_dim), lambda i: (i, 0)),     # x tile (f32)
            pl.BlockSpec((in_dim, h1), lambda i: (0, 0)),     # W1 (resident)
            pl.BlockSpec((1, h1), lambda i: (0, 0)),          # b1
            pl.BlockSpec((h1, h2), lambda i: (0, 0)),         # W2
            pl.BlockSpec((1, h2), lambda i: (0, 0)),          # b2
            pl.BlockSpec((h2, out_pad), lambda i: (0, 0)),    # W3
            pl.BlockSpec((1, out_pad), lambda i: (0, 0)),     # b3 (masked pad)
        ],
        out_specs=pl.BlockSpec((tb, out_size), lambda i: (i, 0)),
        compiler_params=pltpu.CompilerParams(
            dimension_semantics=("parallel",)),
    )(x, prep["w1"], prep["b1"], prep["w2"], prep["b2"],
      prep["w3"], prep["b3"])


def init_params(key, input_size, output_size):
    """Logical (unpadded) params mimicking PyTorch nn.Linear default init.
    Weights stored transposed vs. PyTorch: w_i is [in_features, out_features]."""
    dims = [(input_size, 100), (100, 200), (200, output_size)]
    params = {}
    for idx, (fan_in, fan_out) in enumerate(dims, start=1):
        key, kw, kb = jax.random.split(key, 3)
        bound = 1.0 / jnp.sqrt(fan_in)
        params[f"w{idx}"] = jax.random.uniform(
            kw, (fan_in, fan_out), jnp.float32, -bound, bound)
        params[f"b{idx}"] = jax.random.uniform(
            kb, (1, fan_out), jnp.float32, -bound, bound)
    return params


def prepare_params(params, output_size):
    """One-time: zero-pad feature dims to multiples of 128, cast weights to
    bf16 (biases stay f32), and fold the output-lane softmax mask into b3."""
    def pad_w(w, rows, cols):
        r, c = w.shape
        return jnp.pad(w, ((0, rows - r), (0, cols - c)))

    def pad_b(b, cols, fill=0.0):
        return jnp.pad(b, ((0, 0), (0, cols - b.shape[1])),
                       constant_values=fill)

    in_dim = params["w1"].shape[0]
    h1 = _round_up(params["w1"].shape[1], 128)   # 100 -> 128
    h2 = _round_up(params["w2"].shape[1], 128)   # 200 -> 256
    out_pad = _round_up(output_size, 128)        # 16  -> 128

    return {
        "w1": pad_w(params["w1"], in_dim, h1).astype(jnp.bfloat16),
        "b1": pad_b(params["b1"], h1),
        "w2": pad_w(params["w2"], h1, h2).astype(jnp.bfloat16),
        "b2": pad_b(params["b2"], h2),
        "w3": pad_w(params["w3"], h2, out_pad).astype(jnp.bfloat16),
        # Padded logit lanes get a large finite negative bias (W3 pad columns
        # are zero) so they vanish from the softmax without an in-kernel mask.
        "b3": pad_b(params["b3"], out_pad, fill=-1e30),
        "out_size": output_size,
    }


def reference_forward(x, prep):
    """Pure-JAX reference using the same padded/bf16 operands as the kernel."""
    xf = x.astype(jnp.bfloat16).astype(jnp.float32)
    w1 = prep["w1"].astype(jnp.float32)
    w2 = prep["w2"].astype(jnp.float32)
    w3 = prep["w3"].astype(jnp.float32)
    h1 = _leaky_relu(xf @ w1 + prep["b1"])
    h2 = _leaky_relu(h1.astype(jnp.bfloat16).astype(jnp.float32) @ w2 + prep["b2"])
    logits = h2.astype(jnp.bfloat16).astype(jnp.float32) @ w3 + prep["b3"]
    logits = logits[:, :prep["out_size"]]
    return jax.nn.log_softmax(logits, axis=-1)


def reference_forward_f32(x, params):
    """Full-precision reference on the unpadded params (original semantics)."""
    h1 = _leaky_relu(x @ params["w1"] + params["b1"])
    h2 = _leaky_relu(h1 @ params["w2"] + params["b2"])
    logits = h2 @ params["w3"] + params["b3"]
    return jax.nn.log_softmax(logits, axis=-1)


if __name__ == "__main__":
    key = jax.random.PRNGKey(0)
    key, kx1, kx2 = jax.random.split(key, 3)

    input_size = 32     # inputSize
    output_size = 16    # outputSize

    params = init_params(key, input_size, output_size)
    prep = prepare_params(params, output_size)

    # batch=50: single ragged tile; batch=300: two grid steps (megacore path).
    for batch, kx in ((50, kx1), (300, kx2)):
        x = jax.random.normal(kx, (batch, input_size), jnp.float32)
        out = jax.block_until_ready(ai_forward(x, prep))
        assert out.shape == (batch, output_size)

        ref = reference_forward(x, prep)
        assert jnp.allclose(out, ref, atol=1e-3, rtol=1e-3), \
            f"mismatch vs bf16 reference (batch={batch})"

        ref32 = reference_forward_f32(x, params)
        assert jnp.allclose(out, ref32, atol=5e-2, rtol=5e-2), \
            f"mismatch vs f32 reference (batch={batch})"

    print("KERNEL_OK")
</pallas_src>

<mosaic_0001>
module attributes {stable_mosaic.version = 11 : i64} {
  func.func @_ai_mlp_kernel(%arg0: i32, %arg1: memref<64x32xf32, #tpu.memory_space<vmem>>, %arg2: memref<32x128xbf16, #tpu.memory_space<vmem>>, %arg3: memref<1x128xf32, #tpu.memory_space<vmem>>, %arg4: memref<128x256xbf16, #tpu.memory_space<vmem>>, %arg5: memref<1x256xf32, #tpu.memory_space<vmem>>, %arg6: memref<256x128xbf16, #tpu.memory_space<vmem>>, %arg7: memref<1x128xf32, #tpu.memory_space<vmem>>, %arg8: memref<64x16xf32, #tpu.memory_space<vmem>>) attributes {dimension_semantics = [#tpu.dimension_semantics<parallel>], iteration_bounds = array<i64: 1>, scalar_prefetch = 0 : i64, scratch_operands = 0 : i64, tpu.core_type = #tpu.core_type<tc>, window_params = [{transform_indices = @transform_0, window_bounds = array<i64: 64, 32>}, {pipeline_mode = #tpu.pipeline_mode<synchronous>, transform_indices = @transform_1, window_bounds = array<i64: 32, 128>}, {pipeline_mode = #tpu.pipeline_mode<synchronous>, transform_indices = @transform_2, window_bounds = array<i64: 1, 128>}, {pipeline_mode = #tpu.pipeline_mode<synchronous>, transform_indices = @transform_3, window_bounds = array<i64: 128, 256>}, {pipeline_mode = #tpu.pipeline_mode<synchronous>, transform_indices = @transform_4, window_bounds = array<i64: 1, 256>}, {pipeline_mode = #tpu.pipeline_mode<synchronous>, transform_indices = @transform_5, window_bounds = array<i64: 256, 128>}, {pipeline_mode = #tpu.pipeline_mode<synchronous>, transform_indices = @transform_6, window_bounds = array<i64: 1, 128>}, {transform_indices = @transform_7, window_bounds = array<i64: 64, 16>}]} {
    %c0 = arith.constant 0 : index
    %c0_0 = arith.constant 0 : index
    %0 = vector.load %arg1[%c0, %c0_0] : memref<64x32xf32, #tpu.memory_space<vmem>>, vector<64x32xf32>
    %1 = arith.truncf %0 : vector<64x32xf32> to vector<64x32xbf16>
    %c0_1 = arith.constant 0 : index
    %c0_2 = arith.constant 0 : index
    %2 = vector.load %arg2[%c0_1, %c0_2] : memref<32x128xbf16, #tpu.memory_space<vmem>>, vector<32x128xbf16>
    %cst = arith.constant dense<0.000000e+00> : vector<64x128xf32>
    %3 = tpu.matmul %1, %2, %cst {dimension_numbers = #tpu.dot_dimension_numbers<[1], [0], [0], [1], [0, 0, 1, 1], [], []>} : vector<64x32xbf16>, vector<32x128xbf16>, vector<64x128xf32> -> vector<64x128xf32>
    %c0_3 = arith.constant 0 : index
    %c0_4 = arith.constant 0 : index
    %4 = vector.load %arg3[%c0_3, %c0_4] : memref<1x128xf32, #tpu.memory_space<vmem>>, vector<1x128xf32>
    %5 = vector.broadcast %4 : vector<1x128xf32> to vector<64x128xf32>
    %6 = arith.addf %3, %5 : vector<64x128xf32>
    %cst_5 = arith.constant 0.00999999977 : f32
    %7 = vector.broadcast %cst_5 : f32 to vector<64x128xf32>
    %8 = arith.mulf %7, %6 : vector<64x128xf32>
    %9 = arith.maximumf %6, %8 : vector<64x128xf32>
    %10 = arith.truncf %9 : vector<64x128xf32> to vector<64x128xbf16>
    %c0_6 = arith.constant 0 : index
    %c0_7 = arith.constant 0 : index
    %11 = vector.load %arg4[%c0_6, %c0_7] : memref<128x256xbf16, #tpu.memory_space<vmem>>, vector<128x256xbf16>
    %cst_8 = arith.constant dense<0.000000e+00> : vector<64x256xf32>
    %12 = tpu.matmul %10, %11, %cst_8 {dimension_numbers = #tpu.dot_dimension_numbers<[1], [0], [0], [1], [0, 0, 1, 1], [], []>} : vector<64x128xbf16>, vector<128x256xbf16>, vector<64x256xf32> -> vector<64x256xf32>
    %c0_9 = arith.constant 0 : index
    %c0_10 = arith.constant 0 : index
    %13 = vector.load %arg5[%c0_9, %c0_10] : memref<1x256xf32, #tpu.memory_space<vmem>>, vector<1x256xf32>
    %14 = vector.broadcast %13 : vector<1x256xf32> to vector<64x256xf32>
    %15 = arith.addf %12, %14 : vector<64x256xf32>
    %cst_11 = arith.constant 0.00999999977 : f32
    %16 = vector.broadcast %cst_11 : f32 to vector<64x256xf32>
    %17 = arith.mulf %16, %15 : vector<64x256xf32>
    %18 = arith.maximumf %15, %17 : vector<64x256xf32>
    %19 = arith.truncf %18 : vector<64x256xf32> to vector<64x256xbf16>
    %c0_12 = arith.constant 0 : index
    %c0_13 = arith.constant 0 : index
    %20 = vector.load %arg6[%c0_12, %c0_13] : memref<256x128xbf16, #tpu.memory_space<vmem>>, vector<256x128xbf16>
    %cst_14 = arith.constant dense<0.000000e+00> : vector<64x128xf32>
    %21 = tpu.matmul %19, %20, %cst_14 {dimension_numbers = #tpu.dot_dimension_numbers<[1], [0], [0], [1], [0, 0, 1, 1], [], []>} : vector<64x256xbf16>, vector<256x128xbf16>, vector<64x128xf32> -> vector<64x128xf32>
    %c0_15 = arith.constant 0 : index
    %c0_16 = arith.constant 0 : index
    %22 = vector.load %arg7[%c0_15, %c0_16] : memref<1x128xf32, #tpu.memory_space<vmem>>, vector<1x128xf32>
    %23 = vector.broadcast %22 : vector<1x128xf32> to vector<64x128xf32>
    %24 = arith.addf %21, %23 : vector<64x128xf32>
    %cst_17 = arith.constant dense<0xFF800000> : vector<64xf32>
    %25 = vector.multi_reduction <maximumf>, %24, %cst_17 [1] : vector<64x128xf32> to vector<64xf32>
    %26 = vector.shape_cast %25 : vector<64xf32> to vector<64x1xf32>
    %27 = vector.broadcast %26 : vector<64x1xf32> to vector<64x128xf32>
    %28 = arith.subf %24, %27 : vector<64x128xf32>
    %29 = math.exp %28 : vector<64x128xf32>
    %cst_18 = arith.constant dense<0.000000e+00> : vector<64xf32>
    %30 = vector.multi_reduction <add>, %29, %cst_18 [1] : vector<64x128xf32> to vector<64xf32>
    %31 = vector.shape_cast %30 : vector<64xf32> to vector<64x1xf32>
    %32 = math.log %31 : vector<64x1xf32>
    %33 = vector.extract_strided_slice %28 {offsets = [0, 0], sizes = [64, 16], strides = [1, 1]} : vector<64x128xf32> to vector<64x16xf32>
    %34 = vector.broadcast %32 : vector<64x1xf32> to vector<64x16xf32>
    %35 = arith.subf %33, %34 : vector<64x16xf32>
    %c0_19 = arith.constant 0 : index
    %c0_20 = arith.constant 0 : index
    %36 = vector.load %arg8[%c0_19, %c0_20] : memref<64x16xf32, #tpu.memory_space<vmem>>, vector<64x16xf32>
    tpu.vector_store %arg8[%c0_19, %c0_20], %35 {strides = array<i32>} : memref<64x16xf32, #tpu.memory_space<vmem>>, vector<64x16xf32>,
    return
  }
  func.func @transform_0(%arg0: i32) -> (i32, i32) {
    %c0_i32 = arith.constant 0 : i32
    %c0_i32_0 = arith.constant 0 : i32
    return %arg0, %c0_i32 : i32, i32
  }
  func.func @transform_1(%arg0: i32) -> (i32, i32) {
    %c0_i32 = arith.constant 0 : i32
    %c0_i32_0 = arith.constant 0 : i32
    %c0_i32_1 = arith.constant 0 : i32
    return %c0_i32, %c0_i32_0 : i32, i32
  }
  func.func @transform_2(%arg0: i32) -> (i32, i32) {
    %c0_i32 = arith.constant 0 : i32
    %c0_i32_0 = arith.constant 0 : i32
    %c0_i32_1 = arith.constant 0 : i32
    return %c0_i32, %c0_i32_0 : i32, i32
  }
  func.func @transform_3(%arg0: i32) -> (i32, i32) {
    %c0_i32 = arith.constant 0 : i32
    %c0_i32_0 = arith.constant 0 : i32
    %c0_i32_1 = arith.constant 0 : i32
    return %c0_i32, %c0_i32_0 : i32, i32
  }
  func.func @transform_4(%arg0: i32) -> (i32, i32) {
    %c0_i32 = arith.constant 0 : i32
    %c0_i32_0 = arith.constant 0 : i32
    %c0_i32_1 = arith.constant 0 : i32
    return %c0_i32, %c0_i32_0 : i32, i32
  }
  func.func @transform_5(%arg0: i32) -> (i32, i32) {
    %c0_i32 = arith.constant 0 : i32
    %c0_i32_0 = arith.constant 0 : i32
    %c0_i32_1 = arith.constant 0 : i32
    return %c0_i32, %c0_i32_0 : i32, i32
  }
  func.func @transform_6(%arg0: i32) -> (i32, i32) {
    %c0_i32 = arith.constant 0 : i32
    %c0_i32_0 = arith.constant 0 : i32
    %c0_i32_1 = arith.constant 0 : i32
    return %c0_i32, %c0_i32_0 : i32, i32
  }
  func.func @transform_7(%arg0: i32) -> (i32, i32) {
    %c0_i32 = arith.constant 0 : i32
    %c0_i32_0 = arith.constant 0 : i32
    return %arg0, %c0_i32 : i32, i32
  }
}

</mosaic_0001>

<llo_original>
// kernel: tpu_custom_call.1
$region0: #{tpu_custom_call.1}
  #allocation0 [shape = 'u32[]', space=smem, size = 0x4, offset = 0x4, fixed_abs, tag = 'smem constant byte address 0x4 - core index']
  #allocation1 [shape = 'u32[144,128]{1,0:T(1,128)}', space=vmem, size = 0x12000, scoped, tag = 'internal scratch']
  %s0 = inlined_call_operand.vmem [shape: f32[50,32], index: 0, kind: input, shape index: {}]
  %s1 = inlined_call_operand.vmem [shape: bf16[32,128], index: 1, kind: input, shape index: {}]
  %s2 = inlined_call_operand.vmem [shape: f32[1,128], index: 2, kind: input, shape index: {}]
  %s3 = inlined_call_operand.hbm [shape: bf16[128,256], index: 3, kind: input, shape index: {}]
  %s4 = inlined_call_operand.vmem [shape: f32[1,256], index: 4, kind: input, shape index: {}]
  %s5 = inlined_call_operand.hbm [shape: bf16[256,128], index: 5, kind: input, shape index: {}]
  %s6 = inlined_call_operand.vmem [shape: f32[1,128], index: 6, kind: input, shape index: {}]
  %s7 = inlined_call_operand.vmem [shape: f32[50,16], index: 7, kind: output, shape index: {}]
  %s8 = sld [smem:[#allocation0]]
  $region80: #{tpu_custom_call.1} parent=0
    _
  %s10 = ssub.s32 1, %s8
  %s11 = scalar_select 0, %s10, %s8
  $region1: #{tpu_custom_call.1} parent=0
    #allocation2 [shape = 'u8[65536]{0}', space=vmem, size = 0x10000, scoped, tag = 'input window, operand 3, single buffered']
    #allocation3 [shape = 's32[1]{0}', space=sflag, size = 0x4, scoped, tag = 'scoped memory for tpu_custom_call.1']
    #allocation4 [shape = 'u8[65536]{0}', space=vmem, size = 0x10000, scoped, tag = 'input window, operand 5, single buffered']
    #allocation5 [shape = 's32[1]{0}', space=sflag, size = 0x4, scoped, tag = 'scoped memory for tpu_custom_call.1']
    #allocation6 [shape = 'u8[32768]{0}', space=vmem, size = 0x8000, scoped, tag = 'output window, operand 0, single buffered']
    %12 = vsyncpa [#allocation3], 0
    %13 = vsyncpa [#allocation5], 0
    // Predicated region
    $region2: #{tpu_custom_call.1} parent=1 // pred_check
      _
    $region3: #{tpu_custom_call.1} parent=1 // pred_check_branch
      %15 = sbr.rel (0) target = $region5
    $region4: #{tpu_custom_call.1} parent=1 // pred_region
      _
    $region5: #{tpu_custom_call.1} parent=1 // pred_fallthru
      _
    // Predicated region
    $region6: #{tpu_custom_call.1} parent=1 // pred_check
      _
    $region7: #{tpu_custom_call.1} parent=1 // pred_check_branch
      %17 = sbr.rel (0) target = $region9
    $region8: #{tpu_custom_call.1} parent=1 // pred_region
      _
    $region9: #{tpu_custom_call.1} parent=1 // pred_fallthru
      _
    // Predicated region
    $region10: #{tpu_custom_call.1} parent=1 // pred_check
      _
    $region11: #{tpu_custom_call.1} parent=1 // pred_check_branch
      %19 = sbr.rel (0) target = $region13
    $region12: #{tpu_custom_call.1} parent=1 // pred_region
      _
    $region13: #{tpu_custom_call.1} parent=1 // pred_fallthru
      _
    // Predicated region
    $region14: #{tpu_custom_call.1} parent=1 // pred_check
      _
    $region15: #{tpu_custom_call.1} parent=1 // pred_check_branch
      %21 = sbr.rel (0) target = $region17
    $region16: #{tpu_custom_call.1} parent=1 // pred_region
      %s23 = ssub.s32 2048, 2048
      %24 = vsyncadd [#allocation3], %s23
      %s25 = sshll.u32 [#allocation2], 4
      %s26 = int_to_ptr.vmem [resolvable:$true] %s25
      %31 = dma.hbm_to_vmem [thread:$0]  %s3, 2048, %s26, [#allocation3], 128, 128, 8
    $region17: #{tpu_custom_call.1} parent=1 // pred_fallthru
      _
    // Predicated region
    $region18: #{tpu_custom_call.1} parent=1 // pred_check
      _
    $region19: #{tpu_custom_call.1} parent=1 // pred_check_branch
      %33 = sbr.rel (0) target = $region21
    $region20: #{tpu_custom_call.1} parent=1 // pred_region
      _
    $region21: #{tpu_custom_call.1} parent=1 // pred_fallthru
      _
    // Predicated region
    $region22: #{tpu_custom_call.1} parent=1 // pred_check
      _
    $region23: #{tpu_custom_call.1} parent=1 // pred_check_branch
      %35 = sbr.rel (0) target = $region25
    $region24: #{tpu_custom_call.1} parent=1 // pred_region
      %s37 = ssub.s32 2048, 2048
      %38 = vsyncadd [#allocation5], %s37
      %s39 = sshll.u32 [#allocation4], 4
      %s40 = int_to_ptr.vmem [resolvable:$true] %s39
      %45 = dma.hbm_to_vmem [thread:$0]  %s5, 2048, %s40, [#allocation5], 64, 64, 4
    $region25: #{tpu_custom_call.1} parent=1 // pred_fallthru
      _
    // Predicated region
    $region26: #{tpu_custom_call.1} parent=1 // pred_check
      _
    $region27: #{tpu_custom_call.1} parent=1 // pred_check_branch
      %47 = sbr.rel (0) target = $region29
    $region28: #{tpu_custom_call.1} parent=1 // pred_region
      _
    $region29: #{tpu_custom_call.1} parent=1 // pred_fallthru
      _
    // Predicated region
    $region30: #{tpu_custom_call.1} parent=1 // pred_check
      _
    $region31: #{tpu_custom_call.1} parent=1 // pred_check_branch
      %49 = sbr.rel (0) target = $region33
    $region32: #{tpu_custom_call.1} parent=1 // pred_region
      %50 = dma.done [#allocation3], 2048
    $region33: #{tpu_custom_call.1} parent=1 // pred_fallthru
      _
    // Predicated region
    $region34: #{tpu_custom_call.1} parent=1 // pred_check
      _
    $region35: #{tpu_custom_call.1} parent=1 // pred_check_branch
      %52 = sbr.rel (0) target = $region37
    $region36: #{tpu_custom_call.1} parent=1 // pred_region
      %53 = dma.done [#allocation5], 2048
    $region37: #{tpu_custom_call.1} parent=1 // pred_fallthru
      _
    %v55 = vld [vmem:[%s0] sm:$0xff]
    %v56 = vld [vmem:[%s0 + $0x8] sm:$0xff]
    %v57 = vld [vmem:[%s0 + $0x10] sm:$0xff]
    %v58 = vld [vmem:[%s0 + $0x18] sm:$0xff]
    %v59 = vld [vmem:[%s0 + $0x20] sm:$0xff]
    %v60 = vld [vmem:[%s0 + $0x28] sm:$0xff]
    %v61 = vld [vmem:[%s0 + $0x30] sm:$0xff]
    %v62 = vld [vmem:[%s0 + $0x38] sm:$0xff]
    %v63 = vpack.c.bf16 %v56, %v55
    %v64 = vpack.c.bf16 %v58, %v57
    %v65 = vpack.c.bf16 %v60, %v59
    %v66 = vpack.c.bf16 %v62, %v61
    %v67 = vld [vmem:[%s1] sm:$0xf]
    %v68 = vld [vmem:[%s1 + $0x4] sm:$0xf]
    %v69 = vld [vmem:[%s1 + $0x8] sm:$0xf]
    %v70 = vld [vmem:[%s1 + $0xc] sm:$0xf]
    %v71 = vld [vmem:[%s2] sm:$0x1]
    %v73 = vlaneseq
    %v74 = vshrl.u32 %v73, 7
    %v75 = vsub.s32 0, %v74
    %v76 = vrot.slane %v71, %v75
    %v82 = vunpack.c.l.b16 %v67
    %v83 = vunpack.c.l.b16 %v68
    %v84 = vunpack.c.l.b16 %v69
    %v85 = vunpack.c.l.b16 %v70
    %v86 = vpack.c.b16 %v83, %v82
    %v87 = vpack.c.b16 %v85, %v84
    %vm90 = vcmask 261120
    %v92 = vsel %vm90, %v63, 0
    %v95 = vsel %vm90, %v64, 0
    %v98 = vsel %vm90, %v65, 0
    %v101 = vsel %vm90, %v66, 0
    %103 = vmatprep.subr.bf16.mxu0 0
    %104 = vmatpush1.bf16.msra.mxu0 %v86
    %105 = vmatprep.subr.bf16.mxu0 0
    %106 = vmatpush1.bf16.msra.mxu0 %v87
    %107 = vmatprep.subr.bf16.mxu0 0
    %108 = vmatpush1.bf16.msra.mxu0 0
    %109 = vmatprep.subr.bf16.mxu0 0
    %110 = vmatpush1.bf16.msra.mxu0 0
    %111 = vmatprep.subr.bf16.mxu0 0
    %112 = vmatpush1.bf16.msra.mxu0 0
    %113 = vmatprep.subr.bf16.mxu0 0
    %114 = vmatpush1.bf16.msra.mxu0 0
    %115 = vmatprep.subr.bf16.mxu0 0
    %116 = vmatpush1.bf16.msra.mxu0 0
    %117 = vmatprep.subr.bf16.mxu0 0
    %118 = vmatpush1.bf16.msra.mxu0 0
    %119 = vmatprep.subr.bf16.mxu0 0
    %120 = vmatpush1.bf16.msra.mxu0 0
    %121 = vmatprep.subr.bf16.mxu0 0
    %122 = vmatpush1.bf16.msra.mxu0 0
    %123 = vmatprep.subr.bf16.mxu0 0
    %124 = vmatpush1.bf16.msra.mxu0 0
    %125 = vmatprep.subr.bf16.mxu0 0
    %126 = vmatpush1.bf16.msra.mxu0 0
    %127 = vmatprep.subr.bf16.mxu0 0
    %128 = vmatpush1.bf16.msra.mxu0 0
    %129 = vmatprep.subr.bf16.mxu0 0
    %130 = vmatpush1.bf16.msra.mxu0 0
    %131 = vmatprep.subr.bf16.mxu0 0
    %132 = vmatpush1.bf16.msra.mxu0 0
    %133 = vmatprep.subr.bf16.mxu0 0
    %134 = vmatpush1.bf16.msra.mxu0 0
    %135 = vmatprep.mubr.bf16.mxu0 0
    %136 = vmatmul.mubr.bf16.gmra.mrb[0].mxu0 %v92
    %v137 = vpop.f32.mrb[0].mxu0
    %v138 = vadd.f32 %v76, %v137
    %v139 = vpop.f32.mrb[0].mxu0
    %v140 = vpop.f32.mrb[0].mxu0
    %v141 = vadd.f32 %v76, %v140
    %v142 = vpop.f32.mrb[0].mxu0
    %143 = vmatprep.mubr.bf16.mxu0 0
    %144 = vmatmul.mubr.bf16.gmra.mrb[0].mxu0 %v95
    %v145 = vpop.f32.mrb[0].mxu0
    %v146 = vadd.f32 %v76, %v145
    %v147 = vpop.f32.mrb[0].mxu0
    %v148 = vpop.f32.mrb[0].mxu0
    %v149 = vadd.f32 %v76, %v148
    %v150 = vpop.f32.mrb[0].mxu0
    %151 = vmatprep.mubr.bf16.mxu0 0
    %152 = vmatmul.mubr.bf16.gmra.mrb[0].mxu0 %v98
    %v153 = vpop.f32.mrb[0].mxu0
    %v154 = vadd.f32 %v76, %v153
    %v155 = vpop.f32.mrb[0].mxu0
    %v156 = vpop.f32.mrb[0].mxu0
    %v157 = vadd.f32 %v76, %v156
    %v158 = vpop.f32.mrb[0].mxu0
    %159 = vmatprep.mubr.bf16.mxu0 0
    %160 = vmatmul.mubr.bf16.gmra.mrb[0].mxu0 %v101
    %v161 = vpop.f32.mrb[0].mxu0
    %v162 = vadd.f32 %v76, %v161
    %v163 = vpop.f32.mrb[0].mxu0
    %v164 = vpop.f32.mrb[0].mxu0
    %v165 = vadd.f32 %v76, %v164
    %v166 = vpop.f32.mrb[0].mxu0
    %167 = vdwg.mxu0
    %v168 = vmul.f32 %v138, 0.01
    %v169 = vmul.f32 %v141, 0.01
    %v170 = vmul.f32 %v146, 0.01
    %v171 = vmul.f32 %v149, 0.01
    %v172 = vmul.f32 %v154, 0.01
    %v173 = vmul.f32 %v157, 0.01
    %v174 = vmul.f32 %v162, 0.01
    %v175 = vmul.f32 %v165, 0.01
    %v176 = vmax.f32 %v138, %v168
    %v177 = vmax.f32 %v141, %v169
    %v178 = vmax.f32 %v146, %v170
    %v179 = vmax.f32 %v149, %v171
    %v180 = vmax.f32 %v154, %v172
    %v181 = vmax.f32 %v157, %v173
    %v182 = vmax.f32 %v162, %v174
    %v183 = vmax.f32 %v165, %v175
    %v184 = vpack.c.bf16 %v177, %v176
    %v185 = vpack.c.bf16 %v179, %v178
    %v186 = vpack.c.bf16 %v181, %v180
    %v187 = vpack.c.bf16 %v183, %v182
    %v188 = vld [vmem:[#allocation2] sm:$0xff]
    %v189 = vld [vmem:[#allocation2 + $0x8] sm:$0xff]
    %v190 = vld [vmem:[#allocation2 + $0x10] sm:$0xff]
    %v191 = vld [vmem:[#allocation2 + $0x18] sm:$0xff]
    %v192 = vld [vmem:[#allocation2 + $0x20] sm:$0xff]
    %v193 = vld [vmem:[#allocation2 + $0x28] sm:$0xff]
    %v194 = vld [vmem:[#allocation2 + $0x30] sm:$0xff]
    %v195 = vld [vmem:[#allocation2 + $0x38] sm:$0xff]
    %v196 = vld [vmem:[#allocation2 + $0x40] sm:$0xff]
    %v197 = vld [vmem:[#allocation2 + $0x48] sm:$0xff]
    %v198 = vld [vmem:[#allocation2 + $0x50] sm:$0xff]
    %v199 = vld [vmem:[#allocation2 + $0x58] sm:$0xff]
    %v200 = vld [vmem:[#allocation2 + $0x60] sm:$0xff]
    %v201 = vld [vmem:[#allocation2 + $0x68] sm:$0xff]
    %v202 = vld [vmem:[#allocation2 + $0x70] sm:$0xff]
    %v203 = vld [vmem:[#allocation2 + $0x78] sm:$0xff]
    %v204 = vld [vmem:[%s4] sm:$0x3]
    %v206 = vlaneseq
    %v207 = vshrl.u32 %v206, 7
    %v208 = vsub.s32 0, %v207
    %v209 = vrot.slane %v204, %v208
    %v210 = vlaneseq
    %v211 = vshrl.u32 %v210, 7
    %v212 = vsub.s32 1, %v211
    %v213 = vrot.slane %v204, %v212
    %v232 = vunpack.c.l.b16 %v188
    %v233 = vunpack.c.h.b16 %v188
    %v234 = vunpack.c.l.b16 %v189
    %v235 = vunpack.c.h.b16 %v189
    %v236 = vunpack.c.l.b16 %v190
    %v237 = vunpack.c.h.b16 %v190
    %v238 = vunpack.c.l.b16 %v191
    %v239 = vunpack.c.h.b16 %v191
    %v240 = vunpack.c.l.b16 %v192
    %v241 = vunpack.c.h.b16 %v192
    %v242 = vunpack.c.l.b16 %v193
    %v243 = vunpack.c.h.b16 %v193
    %v244 = vunpack.c.l.b16 %v194
    %v245 = vunpack.c.h.b16 %v194
    %v246 = vunpack.c.l.b16 %v195
    %v247 = vunpack.c.h.b16 %v195
    %v248 = vunpack.c.l.b16 %v196
    %v249 = vunpack.c.h.b16 %v196
    %v250 = vunpack.c.l.b16 %v197
    %v251 = vunpack.c.h.b16 %v197
    %v252 = vunpack.c.l.b16 %v198
    %v253 = vunpack.c.h.b16 %v198
    %v254 = vunpack.c.l.b16 %v199
    %v255 = vunpack.c.h.b16 %v199
    %v256 = vunpack.c.l.b16 %v200
    %v257 = vunpack.c.h.b16 %v200
    %v258 = vunpack.c.l.b16 %v201
    %v259 = vunpack.c.h.b16 %v201
    %v260 = vunpack.c.l.b16 %v202
    %v261 = vunpack.c.h.b16 %v202
    %v262 = vunpack.c.l.b16 %v203
    %v263 = vunpack.c.h.b16 %v203
    %v264 = vpack.c.b16 %v234, %v232
    %v265 = vpack.c.b16 %v235, %v233
    %v266 = vpack.c.b16 %v238, %v236
    %v267 = vpack.c.b16 %v239, %v237
    %v268 = vpack.c.b16 %v242, %v240
    %v269 = vpack.c.b16 %v243, %v241
    %v270 = vpack.c.b16 %v246, %v244
    %v271 = vpack.c.b16 %v247, %v245
    %v272 = vpack.c.b16 %v250, %v248
    %v273 = vpack.c.b16 %v251, %v249
    %v274 = vpack.c.b16 %v254, %v252
    %v275 = vpack.c.b16 %v255, %v253
    %v276 = vpack.c.b16 %v258, %v256
    %v277 = vpack.c.b16 %v259, %v257
    %v278 = vpack.c.b16 %v262, %v260
    %v279 = vpack.c.b16 %v263, %v261
    %296 = vmatprep.subr.bf16.mxu0 %v265
    %297 = vmatpush1.bf16.msra.mxu0 %v264
    %298 = vmatprep.subr.bf16.mxu0 %v267
    %299 = vmatpush1.bf16.msra.mxu0 %v266
    %300 = vmatprep.subr.bf16.mxu0 %v269
    %301 = vmatpush1.bf16.msra.mxu0 %v268
    %302 = vmatprep.subr.bf16.mxu0 %v271
    %303 = vmatpush1.bf16.msra.mxu0 %v270
    %304 = vmatprep.subr.bf16.mxu0 %v273
    %305 = vmatpush1.bf16.msra.mxu0 %v272
    %306 = vmatprep.subr.bf16.mxu0 %v275
    %307 = vmatpush1.bf16.msra.mxu0 %v274
    %308 = vmatprep.subr.bf16.mxu0 %v277
    %309 = vmatpush1.bf16.msra.mxu0 %v276
    %310 = vmatprep.subr.bf16.mxu0 %v279
    %311 = vmatpush1.bf16.msra.mxu0 %v278
    %312 = vmatprep.subr.bf16.mxu0 0
    %313 = vmatpush1.bf16.msra.mxu0 0
    %314 = vmatprep.subr.bf16.mxu0 0
    %315 = vmatpush1.bf16.msra.mxu0 0
    %316 = vmatprep.subr.bf16.mxu0 0
    %317 = vmatpush1.bf16.msra.mxu0 0
    %318 = vmatprep.subr.bf16.mxu0 0
    %319 = vmatpush1.bf16.msra.mxu0 0
    %320 = vmatprep.subr.bf16.mxu0 0
    %321 = vmatpush1.bf16.msra.mxu0 0
    %322 = vmatprep.subr.bf16.mxu0 0
    %323 = vmatpush1.bf16.msra.mxu0 0
    %324 = vmatprep.subr.bf16.mxu0 0
    %325 = vmatpush1.bf16.msra.mxu0 0
    %326 = vmatprep.subr.bf16.mxu0 0
    %327 = vmatpush1.bf16.msra.mxu0 0
    %328 = vmatprep.mubr.bf16.mxu0 0
    %329 = vmatmul.mubr.bf16.gmra.mrb[0].mxu0 %v184
    %v330 = vpop.f32.mrb[0].mxu0
    %v331 = vadd.f32 %v209, %v330
    %v332 = vpop.f32.mrb[0].mxu0
    %v333 = vadd.f32 %v213, %v332
    %v334 = vpop.f32.mrb[0].mxu0
    %v335 = vadd.f32 %v209, %v334
    %v336 = vpop.f32.mrb[0].mxu0
    %v337 = vadd.f32 %v213, %v336
    %338 = vmatprep.mubr.bf16.mxu0 0
    %339 = vmatmul.mubr.bf16.gmra.mrb[0].mxu0 %v185
    %v340 = vpop.f32.mrb[0].mxu0
    %v341 = vadd.f32 %v209, %v340
    %v342 = vpop.f32.mrb[0].mxu0
    %v343 = vadd.f32 %v213, %v342
    %v344 = vpop.f32.mrb[0].mxu0
    %v345 = vadd.f32 %v209, %v344
    %v346 = vpop.f32.mrb[0].mxu0
    %v347 = vadd.f32 %v213, %v346
    %348 = vmatprep.mubr.bf16.mxu0 0
    %349 = vmatmul.mubr.bf16.gmra.mrb[0].mxu0 %v186
    %v350 = vpop.f32.mrb[0].mxu0
    %v351 = vadd.f32 %v209, %v350
    %v352 = vpop.f32.mrb[0].mxu0
    %v353 = vadd.f32 %v213, %v352
    %v354 = vpop.f32.mrb[0].mxu0
    %v355 = vadd.f32 %v209, %v354
    %v356 = vpop.f32.mrb[0].mxu0
    %v357 = vadd.f32 %v213, %v356
    %358 = vmatprep.mubr.bf16.mxu0 0
    %359 = vmatmul.mubr.bf16.gmra.mrb[0].mxu0 %v187
    %v360 = vpop.f32.mrb[0].mxu0
    %v361 = vadd.f32 %v209, %v360
    %v362 = vpop.f32.mrb[0].mxu0
    %v363 = vadd.f32 %v213, %v362
    %v364 = vpop.f32.mrb[0].mxu0
    %v365 = vadd.f32 %v209, %v364
    %v366 = vpop.f32.mrb[0].mxu0
    %v367 = vadd.f32 %v213, %v366
    %368 = vdwg.mxu0
    %v369 = vmul.f32 %v331, 0.01
    %v370 = vmul.f32 %v333, 0.01
    %v371 = vmul.f32 %v335, 0.01
    %v372 = vmul.f32 %v337, 0.01
    %v373 = vmul.f32 %v341, 0.01
    %v374 = vmul.f32 %v343, 0.01
    %v375 = vmul.f32 %v345, 0.01
    %v376 = vmul.f32 %v347, 0.01
    %v377 = vmul.f32 %v351, 0.01
    %v378 = vmul.f32 %v353, 0.01
    %v379 = vmul.f32 %v355, 0.01
    %v380 = vmul.f32 %v357, 0.01
    %v381 = vmul.f32 %v361, 0.01
    %v382 = vmul.f32 %v363, 0.01
    %v383 = vmul.f32 %v365, 0.01
    %v384 = vmul.f32 %v367, 0.01
    %v385 = vmax.f32 %v331, %v369
    %v386 = vmax.f32 %v333, %v370
    %v387 = vmax.f32 %v335, %v371
    %v388 = vmax.f32 %v337, %v372
    %v389 = vmax.f32 %v341, %v373
    %v390 = vmax.f32 %v343, %v374
    %v391 = vmax.f32 %v345, %v375
    %v392 = vmax.f32 %v347, %v376
    %v393 = vmax.f32 %v351, %v377
    %v394 = vmax.f32 %v353, %v378
    %v395 = vmax.f32 %v355, %v379
    %v396 = vmax.f32 %v357, %v380
    %v397 = vmax.f32 %v361, %v381
    %v398 = vmax.f32 %v363, %v382
    %v399 = vmax.f32 %v365, %v383
    %v400 = vmax.f32 %v367, %v384
    %v401 = vpack.c.bf16 %v387, %v385
    %v402 = vpack.c.bf16 %v388, %v386
    %v403 = vpack.c.bf16 %v391, %v389
    %v404 = vpack.c.bf16 %v392, %v390
    %v405 = vpack.c.bf16 %v395, %v393
    %v406 = vpack.c.bf16 %v396, %v394
    %v407 = vpack.c.bf16 %v399, %v397
    %v408 = vpack.c.bf16 %v400, %v398
    %v409 = vld [vmem:[#allocation4] sm:$0xf]
    %v410 = vld [vmem:[#allocation4 + $0x4] sm:$0xf]
    %v411 = vld [vmem:[#allocation4 + $0x8] sm:$0xf]
    %v412 = vld [vmem:[#allocation4 + $0xc] sm:$0xf]
    %v413 = vld [vmem:[#allocation4 + $0x10] sm:$0xf]
    %v414 = vld [vmem:[#allocation4 + $0x14] sm:$0xf]
    %v415 = vld [vmem:[#allocation4 + $0x18] sm:$0xf]
    %v416 = vld [vmem:[#allocation4 + $0x1c] sm:$0xf]
    %v417 = vld [vmem:[#allocation4 + $0x20] sm:$0xf]
    %v418 = vld [vmem:[#allocation4 + $0x24] sm:$0xf]
    %v419 = vld [vmem:[#allocation4 + $0x28] sm:$0xf]
    %v420 = vld [vmem:[#allocation4 + $0x2c] sm:$0xf]
    %v421 = vld [vmem:[#allocation4 + $0x30] sm:$0xf]
    %v422 = vld [vmem:[#allocation4 + $0x34] sm:$0xf]
    %v423 = vld [vmem:[#allocation4 + $0x38] sm:$0xf]
    %v424 = vld [vmem:[#allocation4 + $0x3c] sm:$0xf]
    %v425 = vld [vmem:[#allocation4 + $0x40] sm:$0xf]
    %v426 = vld [vmem:[#allocation4 + $0x44] sm:$0xf]
    %v427 = vld [vmem:[#allocation4 + $0x48] sm:$0xf]
    %v428 = vld [vmem:[#allocation4 + $0x4c] sm:$0xf]
    %v429 = vld [vmem:[#allocation4 + $0x50] sm:$0xf]
    %v430 = vld [vmem:[#allocation4 + $0x54] sm:$0xf]
    %v431 = vld [vmem:[#allocation4 + $0x58] sm:$0xf]
    %v432 = vld [vmem:[#allocation4 + $0x5c] sm:$0xf]
    %v433 = vld [vmem:[#allocation4 + $0x60] sm:$0xf]
    %v434 = vld [vmem:[#allocation4 + $0x64] sm:$0xf]
    %v435 = vld [vmem:[#allocation4 + $0x68] sm:$0xf]
    %v436 = vld [vmem:[#allocation4 + $0x6c] sm:$0xf]
    %v437 = vld [vmem:[#allocation4 + $0x70] sm:$0xf]
    %v438 = vld [vmem:[#allocation4 + $0x74] sm:$0xf]
    %v439 = vld [vmem:[#allocation4 + $0x78] sm:$0xf]
    %v440 = vld [vmem:[#allocation4 + $0x7c] sm:$0xf]
    %v441 = vld [vmem:[%s6] sm:$0x1]
    %v443 = vlaneseq
    %v444 = vshrl.u32 %v443, 7
    %v445 = vsub.s32 0, %v444
    %v446 = vrot.slane %v441, %v445
    %v480 = vunpack.c.l.b16 %v409
    %v481 = vunpack.c.l.b16 %v410
    %v482 = vunpack.c.l.b16 %v411
    %v483 = vunpack.c.l.b16 %v412
    %v484 = vunpack.c.l.b16 %v413
    %v485 = vunpack.c.l.b16 %v414
    %v486 = vunpack.c.l.b16 %v415
    %v487 = vunpack.c.l.b16 %v416
    %v488 = vunpack.c.l.b16 %v417
    %v489 = vunpack.c.l.b16 %v418
    %v490 = vunpack.c.l.b16 %v419
    %v491 = vunpack.c.l.b16 %v420
    %v492 = vunpack.c.l.b16 %v421
    %v493 = vunpack.c.l.b16 %v422
    %v494 = vunpack.c.l.b16 %v423
    %v495 = vunpack.c.l.b16 %v424
    %v496 = vunpack.c.l.b16 %v425
    %v497 = vunpack.c.l.b16 %v426
    %v498 = vunpack.c.l.b16 %v427
    %v499 = vunpack.c.l.b16 %v428
    %v500 = vunpack.c.l.b16 %v429
    %v501 = vunpack.c.l.b16 %v430
    %v502 = vunpack.c.l.b16 %v431
    %v503 = vunpack.c.l.b16 %v432
    %v504 = vunpack.c.l.b16 %v433
    %v505 = vunpack.c.l.b16 %v434
    %v506 = vunpack.c.l.b16 %v435
    %v507 = vunpack.c.l.b16 %v436
    %v508 = vunpack.c.l.b16 %v437
    %v509 = vunpack.c.l.b16 %v438
    %v510 = vunpack.c.l.b16 %v439
    %v511 = vunpack.c.l.b16 %v440
    %v512 = vpack.c.b16 %v481, %v480
    %v513 = vpack.c.b16 %v483, %v482
    %v514 = vpack.c.b16 %v485, %v484
    %v515 = vpack.c.b16 %v487, %v486
    %v516 = vpack.c.b16 %v489, %v488
    %v517 = vpack.c.b16 %v491, %v490
    %v518 = vpack.c.b16 %v493, %v492
    %v519 = vpack.c.b16 %v495, %v494
    %v520 = vpack.c.b16 %v497, %v496
    %v521 = vpack.c.b16 %v499, %v498
    %v522 = vpack.c.b16 %v501, %v500
    %v523 = vpack.c.b16 %v503, %v502
    %v524 = vpack.c.b16 %v505, %v504
    %v525 = vpack.c.b16 %v507, %v506
    %v526 = vpack.c.b16 %v509, %v508
    %v527 = vpack.c.b16 %v511, %v510
    %544 = vmatprep.subr.bf16.mxu0 0
    %545 = vmatpush1.bf16.msra.mxu0 %v512
    %546 = vmatprep.subr.bf16.mxu0 0
    %547 = vmatpush1.bf16.msra.mxu0 %v513
    %548 = vmatprep.subr.bf16.mxu0 0
    %549 = vmatpush1.bf16.msra.mxu0 %v514
    %550 = vmatprep.subr.bf16.mxu0 0
    %551 = vmatpush1.bf16.msra.mxu0 %v515
    %552 = vmatprep.subr.bf16.mxu0 0
    %553 = vmatpush1.bf16.msra.mxu0 %v516
    %554 = vmatprep.subr.bf16.mxu0 0
    %555 = vmatpush1.bf16.msra.mxu0 %v517
    %556 = vmatprep.subr.bf16.mxu0 0
    %557 = vmatpush1.bf16.msra.mxu0 %v518
    %558 = vmatprep.subr.bf16.mxu0 0
    %559 = vmatpush1.bf16.msra.mxu0 %v519
    %560 = vmatprep.subr.bf16.mxu0 0
    %561 = vmatpush1.bf16.msra.mxu0 %v520
    %562 = vmatprep.subr.bf16.mxu0 0
    %563 = vmatpush1.bf16.msra.mxu0 %v521
    %564 = vmatprep.subr.bf16.mxu0 0
    %565 = vmatpush1.bf16.msra.mxu0 %v522
    %566 = vmatprep.subr.bf16.mxu0 0
    %567 = vmatpush1.bf16.msra.mxu0 %v523
    %568 = vmatprep.subr.bf16.mxu0 0
    %569 = vmatpush1.bf16.msra.mxu0 %v524
    %570 = vmatprep.subr.bf16.mxu0 0
    %571 = vmatpush1.bf16.msra.mxu0 %v525
    %572 = vmatprep.subr.bf16.mxu0 0
    %573 = vmatpush1.bf16.msra.mxu0 %v526
    %574 = vmatprep.subr.bf16.mxu0 0
    %575 = vmatpush1.bf16.msra.mxu0 %v527
    %576 = vmatprep.mubr.bf16.mxu0 %v402
    %577 = vmatmul.mubr.bf16.gmra.mrb[0].mxu0 %v401
    %v578 = vpop.f32.mrb[0].mxu0
    %v579 = vadd.f32 %v446, %v578
    %v580 = vpop.f32.mrb[0].mxu0
    %v581 = vpop.f32.mrb[0].mxu0
    %v582 = vadd.f32 %v446, %v581
    %v583 = vpop.f32.mrb[0].mxu0
    %584 = vmatprep.mubr.bf16.mxu0 %v404
    %585 = vmatmul.mubr.bf16.gmra.mrb[0].mxu0 %v403
    %v586 = vpop.f32.mrb[0].mxu0
    %v587 = vadd.f32 %v446, %v586
    %v588 = vpop.f32.mrb[0].mxu0
    %v589 = vpop.f32.mrb[0].mxu0
    %v590 = vadd.f32 %v446, %v589
    %v591 = vpop.f32.mrb[0].mxu0
    %592 = vmatprep.mubr.bf16.mxu0 %v406
    %593 = vmatmul.mubr.bf16.gmra.mrb[0].mxu0 %v405
    %v594 = vpop.f32.mrb[0].mxu0
    %v595 = vadd.f32 %v446, %v594
    %v596 = vpop.f32.mrb[0].mxu0
    %v597 = vpop.f32.mrb[0].mxu0
    %v598 = vadd.f32 %v446, %v597
    %v599 = vpop.f32.mrb[0].mxu0
    %600 = vmatprep.mubr.bf16.mxu0 %v408
    %601 = vmatmul.mubr.bf16.gmra.mrb[0].mxu0 %v407
    %v602 = vpop.f32.mrb[0].mxu0
    %v603 = vadd.f32 %v446, %v602
    %v604 = vpop.f32.mrb[0].mxu0
    %v605 = vpop.f32.mrb[0].mxu0
    %v606 = vadd.f32 %v446, %v605
    %v607 = vpop.f32.mrb[0].mxu0
    %608 = vdwg.mxu0
    %609 = vmax.xlane.f32.xlu0 %v579
    %v610 = vpop.xlane.xlu0 %609
    %611 = vmax.xlane.f32.xlu0 %v582
    %v612 = vpop.xlane.xlu0 %611
    %613 = vmax.xlane.f32.xlu0 %v587
    %v614 = vpop.xlane.xlu0 %613
    %615 = vmax.xlane.f32.xlu0 %v590
    %v616 = vpop.xlane.xlu0 %615
    %617 = vmax.xlane.f32.xlu0 %v595
    %v618 = vpop.xlane.xlu0 %617
    %619 = vmax.xlane.f32.xlu0 %v598
    %v620 = vpop.xlane.xlu0 %619
    %621 = vmax.xlane.f32.xlu0 %v603
    %v622 = vpop.xlane.xlu0 %621
    %623 = vmax.xlane.f32.xlu0 %v606
    %v624 = vpop.xlane.xlu0 %623
    %v625 = vsub.f32 %v579, %v610
    %v626 = vsub.f32 %v582, %v612
    %v627 = vsub.f32 %v587, %v614
    %v628 = vsub.f32 %v590, %v616
    %v629 = vsub.f32 %v595, %v618
    %v630 = vsub.f32 %v598, %v620
    %v631 = vsub.f32 %v603, %v622
    %v632 = vsub.f32 %v606, %v624
    %v633 = vmul.f32 %v625, 1.442695
    %v634 = vpow.pop %v633
    %v635 = vmul.f32 %v626, 1.442695
    %v636 = vpow.pop %v635
    %v637 = vmul.f32 %v627, 1.442695
    %v638 = vpow.pop %v637
    %v639 = vmul.f32 %v628, 1.442695
    %v640 = vpow.pop %v639
    %v641 = vmul.f32 %v629, 1.442695
    %v642 = vpow.pop %v641
    %v643 = vmul.f32 %v630, 1.442695
    %v644 = vpow.pop %v643
    %v645 = vmul.f32 %v631, 1.442695
    %v646 = vpow.pop %v645
    %v647 = vmul.f32 %v632, 1.442695
    %v648 = vpow.pop %v647
    %649 = vadd.xlane.f32.xlu0 %v634
    %v650 = vpop.xlane.xlu0 %649
    %651 = vadd.xlane.f32.xlu0 %v636
    %v652 = vpop.xlane.xlu0 %651
    %653 = vadd.xlane.f32.xlu0 %v638
    %v654 = vpop.xlane.xlu0 %653
    %655 = vadd.xlane.f32.xlu0 %v640
    %v656 = vpop.xlane.xlu0 %655
    %657 = vadd.xlane.f32.xlu0 %v642
    %v658 = vpop.xlane.xlu0 %657
    %659 = vadd.xlane.f32.xlu0 %v644
    %v660 = vpop.xlane.xlu0 %659
    %661 = vadd.xlane.f32.xlu0 %v646
    %v662 = vpop.xlane.xlu0 %661
    %663 = vadd.xlane.f32.xlu0 %v648
    %v664 = vpop.xlane.xlu0 %663
    %v665 = vlog2.pop %v650
    %v666 = vmul.f32 %v665, 0.6931472
    %v667 = vlog2.pop %v652
    %v668 = vmul.f32 %v667, 0.6931472
    %v669 = vlog2.pop %v654
    %v670 = vmul.f32 %v669, 0.6931472
    %v671 = vlog2.pop %v656
    %v672 = vmul.f32 %v671, 0.6931472
    %v673 = vlog2.pop %v658
    %v674 = vmul.f32 %v673, 0.6931472
    %v675 = vlog2.pop %v660
    %v676 = vmul.f32 %v675, 0.6931472
    %v677 = vlog2.pop %v662
    %v678 = vmul.f32 %v677, 0.6931472
    %v679 = vlog2.pop %v664
    %v680 = vmul.f32 %v679, 0.6931472
    %v681 = vsub.f32 %v625, %v666
    %v682 = vsub.f32 %v626, %v668
    %v683 = vsub.f32 %v627, %v670
    %v684 = vsub.f32 %v628, %v672
    %v685 = vsub.f32 %v629, %v674
    %v686 = vsub.f32 %v630, %v676
    %v687 = vsub.f32 %v631, %v678
    %v688 = vsub.f32 %v632, %v680
    %vm689 = vcmask 130048
    %690 = vst.msk [vmem:[#allocation6] sm:$0xff] %vm689, %v681
    %691 = vst.msk [vmem:[#allocation6 + $0x8] sm:$0xff] %vm689, %v682
    %692 = vst.msk [vmem:[#allocation6 + $0x10] sm:$0xff] %vm689, %v683
    %693 = vst.msk [vmem:[#allocation6 + $0x18] sm:$0xff] %vm689, %v684
    %694 = vst.msk [vmem:[#allocation6 + $0x20] sm:$0xff] %vm689, %v685
    %695 = vst.msk [vmem:[#allocation6 + $0x28] sm:$0xff] %vm689, %v686
    %696 = vst.msk [vmem:[#allocation6 + $0x30] sm:$0xff] %vm689, %v687
    %697 = vst.msk [vmem:[#allocation6 + $0x38] sm:$0xff] %vm689, %v688
    // Predicated region
    $region38: #{tpu_custom_call.1} parent=1 // pred_check
      _
    $region39: #{tpu_custom_call.1} parent=1 // pred_check_branch
      %699 = sbr.rel (0) target = $region41
    $region40: #{tpu_custom_call.1} parent=1 // pred_region
      // Predicated region
      $region42: #{tpu_custom_call.1} parent=40 // pred_check
        _
      $region43: #{tpu_custom_call.1} parent=40 // pred_check_branch
        %701 = sbr.rel (0) target = $region45
      $region44: #{tpu_custom_call.1} parent=40 // pred_region
        // Predicated region
        $region46: #{tpu_custom_call.1} parent=44 // pred_check
          _
        $region47: #{tpu_custom_call.1} parent=44 // pred_check_branch
          %703 = sbr.rel (0) target = $region49
        $region48: #{tpu_custom_call.1} parent=44 // pred_region
          // Predicated region
          $region61: #{tpu_custom_call.1} parent=48 // pred_check
            _
          $region62: #{tpu_custom_call.1} parent=48 // pred_check_branch
            %730 = sbr.rel (0) target = $region64
          $region63: #{tpu_custom_call.1} parent=48 // pred_region
            loop: start=0, step=1, limit=1
            $region65: #{tpu_custom_call.1} parent=63 // loop_pre_header
              _
            $region66: #{tpu_custom_call.1} parent=63 // loop_header
              %s732 = sphi 0, %s736
              %p733 = scmp.ge.s32.totalorder %s732, 1
              %s737 = sphi [#allocation6], [#allocation6]
              %s738 = sphi %s7, %s7
            $region67: #{tpu_custom_call.1} parent=63 // loop_header_branch
              %735 = sbr.rel (%p733) target = $region71
            $region68: #{tpu_custom_call.1} parent=63 // loop_body
              %v739 = vld [vmem:[%s737] sm:$0xff]
              %740 = vst [vmem:[%s738] sm:$0xff] %v739
              %v741 = vld [vmem:[%s737 + $0x8] sm:$0xff]
              %742 = vst [vmem:[%s738 + $0x8] sm:$0xff] %v741
              %v743 = vld [vmem:[%s737 + $0x10] sm:$0xff]
              %744 = vst [vmem:[%s738 + $0x10] sm:$0xff] %v743
              %v745 = vld [vmem:[%s737 + $0x18] sm:$0xff]
              %746 = vst [vmem:[%s738 + $0x18] sm:$0xff] %v745
              %v747 = vld [vmem:[%s737 + $0x20] sm:$0xff]
              %748 = vst [vmem:[%s738 + $0x20] sm:$0xff] %v747
              %v749 = vld [vmem:[%s737 + $0x28] sm:$0xff]
              %750 = vst [vmem:[%s738 + $0x28] sm:$0xff] %v749
              %v751 = vld [vmem:[%s737 + $0x30] sm:$0xff]
              %752 = vst [vmem:[%s738 + $0x30] sm:$0xff] %v751
            $region69: #{tpu_custom_call.1} parent=63 // loop_footer
              %s736 = sadd.s32 1, %s732
            $region70: #{tpu_custom_call.1} parent=63 // loop_footer_branch
              %731 = sbr.rel target = $region66
            $region71: #{tpu_custom_call.1} parent=63 // loop_exit
              _
          $region64: #{tpu_custom_call.1} parent=48 // pred_fallthru
            _
          // Predicated region
          $region72: #{tpu_custom_call.1} parent=48 // pred_check
            _
          $region73: #{tpu_custom_call.1} parent=48 // pred_check_branch
            %754 = sbr.rel target = $region75
          $region74: #{tpu_custom_call.1} parent=48 // pred_region
            _
          $region75: #{tpu_custom_call.1} parent=48 // pred_fallthru
            _
        $region49: #{tpu_custom_call.1} parent=44 // pred_fallthru
          _
        // Predicated region
        $region50: #{tpu_custom_call.1} parent=44 // pred_check
          _
        $region51: #{tpu_custom_call.1} parent=44 // pred_check_branch
          %705 = sbr.rel target = $region53
        $region52: #{tpu_custom_call.1} parent=44 // pred_region
          loop: start=0, step=1, limit=1
          $region54: #{tpu_custom_call.1} parent=52 // loop_pre_header
            _
          $region55: #{tpu_custom_call.1} parent=52 // loop_header
            %s708 = sphi 0, %s712
            %p709 = scmp.ge.s32.totalorder %s708, 1
            %s713 = sphi [#allocation6], [#allocation6]
            %s714 = sphi %s7, %s7
          $region56: #{tpu_custom_call.1} parent=52 // loop_header_branch
            %711 = sbr.rel (%p709) target = $region60
          $region57: #{tpu_custom_call.1} parent=52 // loop_body
            %v715 = vld [vmem:[%s713] sm:$0xff]
            %716 = vst [vmem:[%s714] sm:$0xff] %v715
            %v717 = vld [vmem:[%s713 + $0x8] sm:$0xff]
            %718 = vst [vmem:[%s714 + $0x8] sm:$0xff] %v717
            %v719 = vld [vmem:[%s713 + $0x10] sm:$0xff]
            %720 = vst [vmem:[%s714 + $0x10] sm:$0xff] %v719
            %v721 = vld [vmem:[%s713 + $0x18] sm:$0xff]
            %722 = vst [vmem:[%s714 + $0x18] sm:$0xff] %v721
            %v723 = vld [vmem:[%s713 + $0x20] sm:$0xff]
            %724 = vst [vmem:[%s714 + $0x20] sm:$0xff] %v723
            %v725 = vld [vmem:[%s713 + $0x28] sm:$0xff]
            %726 = vst [vmem:[%s714 + $0x28] sm:$0xff] %v725
            %v727 = vld [vmem:[%s713 + $0x30] sm:$0xff]
            %728 = vst [vmem:[%s714 + $0x30] sm:$0xff] %v727
          $region58: #{tpu_custom_call.1} parent=52 // loop_footer
            %s712 = sadd.s32 1, %s708
          $region59: #{tpu_custom_call.1} parent=52 // loop_footer_branch
            %707 = sbr.rel target = $region55
          $region60: #{tpu_custom_call.1} parent=52 // loop_exit
            _
        $region53: #{tpu_custom_call.1} parent=44 // pred_fallthru
          _
      $region45: #{tpu_custom_call.1} parent=40 // pred_fallthru
        _
      %755 = vnop
    $region41: #{tpu_custom_call.1} parent=1 // pred_fallthru
      _
    // Predicated region
    $region76: #{tpu_custom_call.1} parent=1 // pred_check
      _
    $region77: #{tpu_custom_call.1} parent=1 // pred_check_branch
      %757 = sbr.rel (0) target = $region79
    $region78: #{tpu_custom_call.1} parent=1 // pred_region
      _
    $region79: #{tpu_custom_call.1} parent=1 // pred_fallthru
      _
    %758 = vsyncpa [#allocation3], 1
    %759 = vsyncpa [#allocation5], 1

</llo_original>
